<compile_context>
chip_gen: v7x
topology: tpu7x:2x2x1
jax: 0.10.0
libtpu: 0.0.40
codegen_flags: <defaults>
</compile_context>

<pallas_src>
import functools

import jax
import jax.numpy as jnp
from jax.experimental import pallas as pl
from jax.experimental.pallas import tpu as pltpu

HIDDEN = 128
LANE = 128


def _round_up(x, m):
    return ((x + m - 1) // m) * m


def dqn_kernel(x_ref, w1_ref, b1_ref, w2_ref, b2_ref, w3_ref, b3_ref, o_ref):
    # Layer 1 + ReLU (MXU matmul, f32 accumulation, f32 bias).
    x = x_ref[...]
    h1 = jnp.dot(x, w1_ref[...], preferred_element_type=jnp.float32) + b1_ref[...]
    h1 = jnp.maximum(h1, 0.0).astype(x.dtype)
    # Layer 2 + ReLU.
    h2 = jnp.dot(h1, w2_ref[...], preferred_element_type=jnp.float32) + b2_ref[...]
    h2 = jnp.maximum(h2, 0.0).astype(x.dtype)
    # Layer 3 (no activation), lane-dense (TB, 128) store.
    out = jnp.dot(h2, w3_ref[...], preferred_element_type=jnp.float32) + b3_ref[...]
    o_ref[...] = out.astype(o_ref.dtype)


def prepare_params(params, compute_dtype=jnp.float32):
    """One-time param prep (do NOT call per forward step):
       - transpose weights to (in_features, out_features),
       - pad the last layer to 128 output lanes (lane-dense stores),
       - cast weights to the compute dtype (biases stay f32; accumulation is f32)."""
    out_size = int(params["w3"].shape[0])
    out_pad = _round_up(max(out_size, 1), LANE)

    w1 = params["w1"].T.astype(compute_dtype)                # (in, 128)
    w2 = params["w2"].T.astype(compute_dtype)                # (128, 128)
    w3 = jnp.zeros((HIDDEN, out_pad), compute_dtype).at[:, :out_size].set(
        params["w3"].T.astype(compute_dtype))                 # (128, out_pad)
    b1 = params["b1"][None, :].astype(jnp.float32)            # (1, 128)
    b2 = params["b2"][None, :].astype(jnp.float32)            # (1, 128)
    b3 = jnp.zeros((1, out_pad), jnp.float32).at[:, :out_size].set(
        params["b3"][None, :].astype(jnp.float32))             # (1, out_pad)

    return {"w1": w1, "b1": b1, "w2": w2, "b2": b2, "w3": w3, "b3": b3,
            "out_size": out_size}


@functools.partial(jax.jit, static_argnames=("out_size", "tb"))
def _dqn_forward_impl(x, w1, b1, w2, b2, w3, b3, *, out_size, tb=None):
    compute_dtype = w1.dtype
    batch, in_size = x.shape
    out_pad = w3.shape[1]

    # Batch tile: MXU-height-friendly, vreg-pressure-safe (128 f32 / 256 bf16),
    # never larger than the (8-rounded) batch itself.
    if tb is None:
        default_tb = 256 if compute_dtype == jnp.bfloat16 else 128
        tb = min(default_tb, _round_up(batch, 8))
    padded_batch = _round_up(batch, tb)

    x = x.astype(compute_dtype)
    if padded_batch != batch:
        x = jnp.pad(x, ((0, padded_batch - batch), (0, 0)))

    grid = (padded_batch // tb,)

    flops = 2 * padded_batch * (in_size * HIDDEN + HIDDEN * HIDDEN + HIDDEN * out_pad)
    bytes_accessed = (
        x.size * x.dtype.itemsize
        + sum(a.size * a.dtype.itemsize for a in (w1, b1, w2, b2, w3, b3))
        + padded_batch * out_pad * 4)
    cost = pl.CostEstimate(flops=flops, transcendentals=0,
                           bytes_accessed=bytes_accessed)

    out = pl.pallas_call(
        dqn_kernel,
        out_shape=jax.ShapeDtypeStruct((padded_batch, out_pad), jnp.float32),
        grid_spec=pltpu.PrefetchScalarGridSpec(
            num_scalar_prefetch=0,
            grid=grid,
            in_specs=[
                pl.BlockSpec((tb, in_size), lambda i: (i, 0)),          # x tile
                pl.BlockSpec((in_size, HIDDEN), lambda i: (0, 0)),      # w1 resident
                pl.BlockSpec((1, HIDDEN), lambda i: (0, 0)),            # b1 resident
                pl.BlockSpec((HIDDEN, HIDDEN), lambda i: (0, 0)),       # w2 resident
                pl.BlockSpec((1, HIDDEN), lambda i: (0, 0)),            # b2 resident
                pl.BlockSpec((HIDDEN, out_pad), lambda i: (0, 0)),      # w3 resident
                pl.BlockSpec((1, out_pad), lambda i: (0, 0)),           # b3 resident
            ],
            out_specs=pl.BlockSpec((tb, out_pad), lambda i: (i, 0)),    # lane-dense
        ),
        compiler_params=pltpu.CompilerParams(
            dimension_semantics=("parallel",)),
        cost_estimate=cost,
    )(x, w1, b1, w2, b2, w3, b3)

    # Static slice (batch and out_size are both Python ints under this trace).
    return out[:batch, :out_size]


def dqn_forward(x, prepared, tb=None):
    """Forward pass. `prepared` is the output of prepare_params()."""
    return _dqn_forward_impl(
        x,
        prepared["w1"], prepared["b1"],
        prepared["w2"], prepared["b2"],
        prepared["w3"], prepared["b3"],
        out_size=prepared["out_size"],
        tb=tb,
    )


def init_dqn_params(key, input_size, output_size):
    """PyTorch-convention params: W [out,in] kaiming_normal_, b [out] uniform."""
    k1, k2, k3, k4, k5, k6 = jax.random.split(key, 6)

    def kaiming(k, out_f, in_f):
        return jax.random.normal(k, (out_f, in_f), jnp.float32) * jnp.sqrt(2.0 / in_f)

    def bias(k, out_f, in_f):
        bound = 1.0 / jnp.sqrt(in_f)
        return jax.random.uniform(k, (out_f,), jnp.float32, -bound, bound)

    return {
        "w1": kaiming(k1, HIDDEN, input_size),
        "b1": bias(k2, HIDDEN, input_size),
        "w2": kaiming(k3, HIDDEN, HIDDEN),
        "b2": bias(k4, HIDDEN, HIDDEN),
        "w3": kaiming(k5, output_size, HIDDEN),
        "b3": bias(k6, output_size, HIDDEN),
    }


def dqn_reference(x, params):
    h1 = jnp.maximum(x @ params["w1"].T + params["b1"], 0.0)
    h2 = jnp.maximum(h1 @ params["w2"].T + params["b2"], 0.0)
    return h2 @ params["w3"].T + params["b3"]


if __name__ == "__main__":
    key = jax.random.PRNGKey(0)
    k_x, k_p = jax.random.split(key)

    batch = 8
    input_size = 16   # small observation vector
    output_size = 4   # number of discrete actions

    x = jax.random.normal(k_x, (batch, input_size), jnp.float32)
    params = init_dqn_params(k_p, input_size, output_size)
    ref = dqn_reference(x, params)

    # Exact f32 path.
    prepared_f32 = prepare_params(params, compute_dtype=jnp.float32)
    out_f32 = jax.block_until_ready(dqn_forward(x, prepared_f32))
    assert out_f32.shape == (batch, output_size)
    assert jnp.allclose(out_f32, ref, atol=1e-4, rtol=1e-4)

    # Non-multiple-of-tile batch (typical single-state action selection).
    x_small = x[:3]
    out_small = jax.block_until_ready(dqn_forward(x_small, prepared_f32))
    assert out_small.shape == (3, output_size)
    assert jnp.allclose(out_small, ref[:3], atol=1e-4, rtol=1e-4)

    # Fast bf16-operand path (f32 accumulation) — looser tolerance.
    prepared_bf16 = prepare_params(params, compute_dtype=jnp.bfloat16)
    out_bf16 = jax.block_until_ready(dqn_forward(x, prepared_bf16))
    assert out_bf16.shape == (batch, output_size)
    assert jnp.allclose(out_bf16, ref, atol=5e-2, rtol=5e-2)

    print("KERNEL_OK")
</pallas_src>

<mosaic_0001>
module attributes {stable_mosaic.version = 11 : i64} {
  func.func @dqn_kernel(%arg0: i32, %arg1: memref<8x16xf32, #tpu.memory_space<vmem>>, %arg2: memref<16x128xf32, #tpu.memory_space<vmem>>, %arg3: memref<1x128xf32, #tpu.memory_space<vmem>>, %arg4: memref<128x128xf32, #tpu.memory_space<vmem>>, %arg5: memref<1x128xf32, #tpu.memory_space<vmem>>, %arg6: memref<128x128xf32, #tpu.memory_space<vmem>>, %arg7: memref<1x128xf32, #tpu.memory_space<vmem>>, %arg8: memref<8x128xf32, #tpu.memory_space<vmem>>) attributes {dimension_semantics = [#tpu.dimension_semantics<parallel>], iteration_bounds = array<i64: 1>, scalar_prefetch = 0 : i64, scratch_operands = 0 : i64, tpu.core_type = #tpu.core_type<tc>, window_params = [{transform_indices = @transform_0, window_bounds = array<i64: 8, 16>}, {pipeline_mode = #tpu.pipeline_mode<synchronous>, transform_indices = @transform_1, window_bounds = array<i64: 16, 128>}, {pipeline_mode = #tpu.pipeline_mode<synchronous>, transform_indices = @transform_2, window_bounds = array<i64: 1, 128>}, {pipeline_mode = #tpu.pipeline_mode<synchronous>, transform_indices = @transform_3, window_bounds = array<i64: 128, 128>}, {pipeline_mode = #tpu.pipeline_mode<synchronous>, transform_indices = @transform_4, window_bounds = array<i64: 1, 128>}, {pipeline_mode = #tpu.pipeline_mode<synchronous>, transform_indices = @transform_5, window_bounds = array<i64: 128, 128>}, {pipeline_mode = #tpu.pipeline_mode<synchronous>, transform_indices = @transform_6, window_bounds = array<i64: 1, 128>}, {transform_indices = @transform_7, window_bounds = array<i64: 8, 128>}]} {
    %c0 = arith.constant 0 : index
    %c0_0 = arith.constant 0 : index
    %0 = vector.load %arg1[%c0, %c0_0] : memref<8x16xf32, #tpu.memory_space<vmem>>, vector<8x16xf32>
    %c0_1 = arith.constant 0 : index
    %c0_2 = arith.constant 0 : index
    %1 = vector.load %arg2[%c0_1, %c0_2] : memref<16x128xf32, #tpu.memory_space<vmem>>, vector<16x128xf32>
    %cst = arith.constant dense<0.000000e+00> : vector<8x128xf32>
    %2 = tpu.matmul %0, %1, %cst {dimension_numbers = #tpu.dot_dimension_numbers<[1], [0], [0], [1], [0, 0, 1, 1], [], []>} : vector<8x16xf32>, vector<16x128xf32>, vector<8x128xf32> -> vector<8x128xf32>
    %c0_3 = arith.constant 0 : index
    %c0_4 = arith.constant 0 : index
    %3 = vector.load %arg3[%c0_3, %c0_4] : memref<1x128xf32, #tpu.memory_space<vmem>>, vector<1x128xf32>
    %4 = vector.broadcast %3 : vector<1x128xf32> to vector<8x128xf32>
    %5 = arith.addf %2, %4 : vector<8x128xf32>
    %cst_5 = arith.constant 0.000000e+00 : f32
    %6 = vector.broadcast %cst_5 : f32 to vector<8x128xf32>
    %7 = arith.maximumf %5, %6 : vector<8x128xf32>
    %c0_6 = arith.constant 0 : index
    %c0_7 = arith.constant 0 : index
    %8 = vector.load %arg4[%c0_6, %c0_7] : memref<128x128xf32, #tpu.memory_space<vmem>>, vector<128x128xf32>
    %cst_8 = arith.constant dense<0.000000e+00> : vector<8x128xf32>
    %9 = tpu.matmul %7, %8, %cst_8 {dimension_numbers = #tpu.dot_dimension_numbers<[1], [0], [0], [1], [0, 0, 1, 1], [], []>} : vector<8x128xf32>, vector<128x128xf32>, vector<8x128xf32> -> vector<8x128xf32>
    %c0_9 = arith.constant 0 : index
    %c0_10 = arith.constant 0 : index
    %10 = vector.load %arg5[%c0_9, %c0_10] : memref<1x128xf32, #tpu.memory_space<vmem>>, vector<1x128xf32>
    %11 = vector.broadcast %10 : vector<1x128xf32> to vector<8x128xf32>
    %12 = arith.addf %9, %11 : vector<8x128xf32>
    %cst_11 = arith.constant 0.000000e+00 : f32
    %13 = vector.broadcast %cst_11 : f32 to vector<8x128xf32>
    %14 = arith.maximumf %12, %13 : vector<8x128xf32>
    %c0_12 = arith.constant 0 : index
    %c0_13 = arith.constant 0 : index
    %15 = vector.load %arg6[%c0_12, %c0_13] : memref<128x128xf32, #tpu.memory_space<vmem>>, vector<128x128xf32>
    %cst_14 = arith.constant dense<0.000000e+00> : vector<8x128xf32>
    %16 = tpu.matmul %14, %15, %cst_14 {dimension_numbers = #tpu.dot_dimension_numbers<[1], [0], [0], [1], [0, 0, 1, 1], [], []>} : vector<8x128xf32>, vector<128x128xf32>, vector<8x128xf32> -> vector<8x128xf32>
    %c0_15 = arith.constant 0 : index
    %c0_16 = arith.constant 0 : index
    %17 = vector.load %arg7[%c0_15, %c0_16] : memref<1x128xf32, #tpu.memory_space<vmem>>, vector<1x128xf32>
    %18 = vector.broadcast %17 : vector<1x128xf32> to vector<8x128xf32>
    %19 = arith.addf %16, %18 : vector<8x128xf32>
    %c0_17 = arith.constant 0 : index
    %c0_18 = arith.constant 0 : index
    %20 = vector.load %arg8[%c0_17, %c0_18] : memref<8x128xf32, #tpu.memory_space<vmem>>, vector<8x128xf32>
    tpu.vector_store %arg8[%c0_17, %c0_18], %19 {strides = array<i32>} : memref<8x128xf32, #tpu.memory_space<vmem>>, vector<8x128xf32>,
    return
  }
  func.func @transform_0(%arg0: i32) -> (i32, i32) {
    %c0_i32 = arith.constant 0 : i32
    %c0_i32_0 = arith.constant 0 : i32
    return %arg0, %c0_i32 : i32, i32
  }
  func.func @transform_1(%arg0: i32) -> (i32, i32) {
    %c0_i32 = arith.constant 0 : i32
    %c0_i32_0 = arith.constant 0 : i32
    %c0_i32_1 = arith.constant 0 : i32
    return %c0_i32, %c0_i32_0 : i32, i32
  }
  func.func @transform_2(%arg0: i32) -> (i32, i32) {
    %c0_i32 = arith.constant 0 : i32
    %c0_i32_0 = arith.constant 0 : i32
    %c0_i32_1 = arith.constant 0 : i32
    return %c0_i32, %c0_i32_0 : i32, i32
  }
  func.func @transform_3(%arg0: i32) -> (i32, i32) {
    %c0_i32 = arith.constant 0 : i32
    %c0_i32_0 = arith.constant 0 : i32
    %c0_i32_1 = arith.constant 0 : i32
    return %c0_i32, %c0_i32_0 : i32, i32
  }
  func.func @transform_4(%arg0: i32) -> (i32, i32) {
    %c0_i32 = arith.constant 0 : i32
    %c0_i32_0 = arith.constant 0 : i32
    %c0_i32_1 = arith.constant 0 : i32
    return %c0_i32, %c0_i32_0 : i32, i32
  }
  func.func @transform_5(%arg0: i32) -> (i32, i32) {
    %c0_i32 = arith.constant 0 : i32
    %c0_i32_0 = arith.constant 0 : i32
    %c0_i32_1 = arith.constant 0 : i32
    return %c0_i32, %c0_i32_0 : i32, i32
  }
  func.func @transform_6(%arg0: i32) -> (i32, i32) {
    %c0_i32 = arith.constant 0 : i32
    %c0_i32_0 = arith.constant 0 : i32
    %c0_i32_1 = arith.constant 0 : i32
    return %c0_i32, %c0_i32_0 : i32, i32
  }
  func.func @transform_7(%arg0: i32) -> (i32, i32) {
    %c0_i32 = arith.constant 0 : i32
    %c0_i32_0 = arith.constant 0 : i32
    return %arg0, %c0_i32 : i32, i32
  }
}

</mosaic_0001>

<llo_original>
// kernel: _dqn_forward_impl.1
$region0: #{_dqn_forward_impl.1}
  #allocation0 [shape = 'u32[]', space=smem, size = 0x4, offset = 0x4, fixed_abs, tag = 'smem constant byte address 0x4 - core index']
  #allocation1 [shape = 'u32[144,128]{1,0:T(1,128)}', space=vmem, size = 0x12000, scoped, tag = 'internal scratch']
  %s0 = inlined_call_operand.hbm [shape: f32[8,16], index: 0, kind: input, shape index: {}]
  %s1 = inlined_call_operand.hbm [shape: f32[16,128], index: 1, kind: input, shape index: {}]
  %s2 = inlined_call_operand.vmem [shape: f32[1,128], index: 2, kind: input, shape index: {}]
  %s3 = inlined_call_operand.hbm [shape: f32[128,128], index: 3, kind: input, shape index: {}]
  %s4 = inlined_call_operand.vmem [shape: f32[1,128], index: 4, kind: input, shape index: {}]
  %s5 = inlined_call_operand.hbm [shape: f32[128,128], index: 5, kind: input, shape index: {}]
  %s6 = inlined_call_operand.vmem [shape: f32[1,128], index: 6, kind: input, shape index: {}]
  %s7 = inlined_call_operand.vmem [shape: f32[8,128], index: 7, kind: output, shape index: {}]
  %s8 = sld [smem:[#allocation0]]
  $region54: #{_dqn_forward_impl.1} parent=0
    _
  %s10 = ssub.s32 1, %s8
  %s11 = scalar_select 0, %s10, %s8
  $region1: #{_dqn_forward_impl.1} parent=0
    #allocation2 [shape = 'u8[4096]{0}', space=vmem, size = 0x1000, scoped, tag = 'input window, operand 0, single buffered']
    #allocation3 [shape = 's32[1]{0}', space=sflag, size = 0x4, scoped, tag = 'scoped memory for _dqn_forward_impl.1']
    #allocation4 [shape = 'u8[8192]{0}', space=vmem, size = 0x2000, scoped, tag = 'input window, operand 1, single buffered']
    #allocation5 [shape = 's32[1]{0}', space=sflag, size = 0x4, scoped, tag = 'scoped memory for _dqn_forward_impl.1']
    #allocation6 [shape = 'u8[65536]{0}', space=vmem, size = 0x10000, scoped, tag = 'input window, operand 3, single buffered']
    #allocation7 [shape = 'u8[65536]{0}', space=vmem, size = 0x10000, scoped, tag = 'input window, operand 5, single buffered']
    #allocation8 [shape = 's32[1]{0}', space=sflag, size = 0x4, scoped, tag = 'scoped memory for _dqn_forward_impl.1']
    %12 = vsyncpa [#allocation3], 0
    %13 = vsyncpa [#allocation5], 0
    %14 = vsyncpa [#allocation8], 0
    // Predicated region
    $region2: #{_dqn_forward_impl.1} parent=1 // pred_check
      _
    $region3: #{_dqn_forward_impl.1} parent=1 // pred_check_branch
      %16 = sbr.rel (0) target = $region5
    $region4: #{_dqn_forward_impl.1} parent=1 // pred_region
      %s18 = ssub.s32 128, 128
      %19 = vsyncadd [#allocation3], %s18
      %s21 = sshll.u32 [#allocation2], 4
      %s22 = int_to_ptr.vmem [resolvable:$true] %s21
      %24 = dma.hbm_to_vmem [thread:$0]  %s0, 128, %s22, [#allocation3]
    $region5: #{_dqn_forward_impl.1} parent=1 // pred_fallthru
      _
    // Predicated region
    $region6: #{_dqn_forward_impl.1} parent=1 // pred_check
      _
    $region7: #{_dqn_forward_impl.1} parent=1 // pred_check_branch
      %26 = sbr.rel (0) target = $region9
    $region8: #{_dqn_forward_impl.1} parent=1 // pred_region
      %s28 = ssub.s32 256, 256
      %29 = vsyncadd [#allocation5], %s28
      %s30 = sshll.u32 [#allocation4], 4
      %s31 = int_to_ptr.vmem [resolvable:$true] %s30
      %36 = dma.hbm_to_vmem [thread:$0]  %s1, 256, %s31, [#allocation5], 128, 128, 8
    $region9: #{_dqn_forward_impl.1} parent=1 // pred_fallthru
      _
    // Predicated region
    $region10: #{_dqn_forward_impl.1} parent=1 // pred_check
      _
    $region11: #{_dqn_forward_impl.1} parent=1 // pred_check_branch
      %38 = sbr.rel (0) target = $region13
    $region12: #{_dqn_forward_impl.1} parent=1 // pred_region
      _
    $region13: #{_dqn_forward_impl.1} parent=1 // pred_fallthru
      _
    // Predicated region
    $region14: #{_dqn_forward_impl.1} parent=1 // pred_check
      _
    $region15: #{_dqn_forward_impl.1} parent=1 // pred_check_branch
      %40 = sbr.rel (0) target = $region17
    $region16: #{_dqn_forward_impl.1} parent=1 // pred_region
      %s42 = ssub.s32 2048, 2048
      %43 = vsyncadd [#allocation5], %s42
      %s44 = sshll.u32 [#allocation6], 4
      %s45 = int_to_ptr.vmem [resolvable:$true] %s44
      %50 = dma.hbm_to_vmem [thread:$0]  %s3, 2048, %s45, [#allocation5], 128, 128, 8
    $region17: #{_dqn_forward_impl.1} parent=1 // pred_fallthru
      _
    // Predicated region
    $region18: #{_dqn_forward_impl.1} parent=1 // pred_check
      _
    $region19: #{_dqn_forward_impl.1} parent=1 // pred_check_branch
      %52 = sbr.rel (0) target = $region21
    $region20: #{_dqn_forward_impl.1} parent=1 // pred_region
      _
    $region21: #{_dqn_forward_impl.1} parent=1 // pred_fallthru
      _
    // Predicated region
    $region22: #{_dqn_forward_impl.1} parent=1 // pred_check
      _
    $region23: #{_dqn_forward_impl.1} parent=1 // pred_check_branch
      %54 = sbr.rel (0) target = $region25
    $region24: #{_dqn_forward_impl.1} parent=1 // pred_region
      %s56 = ssub.s32 2048, 2048
      %57 = vsyncadd [#allocation8], %s56
      %s58 = sshll.u32 [#allocation7], 4
      %s59 = int_to_ptr.vmem [resolvable:$true] %s58
      %64 = dma.hbm_to_vmem [thread:$0]  %s5, 2048, %s59, [#allocation8], 128, 128, 8
    $region25: #{_dqn_forward_impl.1} parent=1 // pred_fallthru
      _
    // Predicated region
    $region26: #{_dqn_forward_impl.1} parent=1 // pred_check
      _
    $region27: #{_dqn_forward_impl.1} parent=1 // pred_check_branch
      %66 = sbr.rel (0) target = $region29
    $region28: #{_dqn_forward_impl.1} parent=1 // pred_region
      _
    $region29: #{_dqn_forward_impl.1} parent=1 // pred_fallthru
      _
    // Predicated region
    $region30: #{_dqn_forward_impl.1} parent=1 // pred_check
      _
    $region31: #{_dqn_forward_impl.1} parent=1 // pred_check_branch
      %68 = sbr.rel (0) target = $region33
    $region32: #{_dqn_forward_impl.1} parent=1 // pred_region
      %69 = dma.done [#allocation3], 128
    $region33: #{_dqn_forward_impl.1} parent=1 // pred_fallthru
      _
    // Predicated region
    $region34: #{_dqn_forward_impl.1} parent=1 // pred_check
      _
    $region35: #{_dqn_forward_impl.1} parent=1 // pred_check_branch
      %71 = sbr.rel (0) target = $region37
    $region36: #{_dqn_forward_impl.1} parent=1 // pred_region
      %72 = dma.done [#allocation5], 256
    $region37: #{_dqn_forward_impl.1} parent=1 // pred_fallthru
      _
    // Predicated region
    $region38: #{_dqn_forward_impl.1} parent=1 // pred_check
      _
    $region39: #{_dqn_forward_impl.1} parent=1 // pred_check_branch
      %74 = sbr.rel (0) target = $region41
    $region40: #{_dqn_forward_impl.1} parent=1 // pred_region
      %75 = dma.done [#allocation5], 2048
    $region41: #{_dqn_forward_impl.1} parent=1 // pred_fallthru
      _
    // Predicated region
    $region42: #{_dqn_forward_impl.1} parent=1 // pred_check
      _
    $region43: #{_dqn_forward_impl.1} parent=1 // pred_check_branch
      %77 = sbr.rel (0) target = $region45
    $region44: #{_dqn_forward_impl.1} parent=1 // pred_region
      %78 = dma.done [#allocation8], 2048
    $region45: #{_dqn_forward_impl.1} parent=1 // pred_fallthru
      _
    %v79 = vld [vmem:[#allocation2] sm:$0xff]
    %v80 = vld [vmem:[#allocation4] sm:$0xff]
    %v81 = vld [vmem:[#allocation4 + $0x8] sm:$0xff]
    %v82 = vld [vmem:[%s2] sm:$0x1]
    %v84 = vlaneseq
    %v85 = vshrl.u32 %v84, 7
    %v86 = vsub.s32 0, %v85
    %v87 = vrot.slane %v82, %v86
    %vm89 = vcmask 130048
    %v91 = vsel %vm89, %v79, 0
    %93 = vmatprep.subr.mxu0 0.0
    %94 = vmatpush1.msra.mxu0 %v80
    %95 = vmatprep.subr.mxu0 0.0
    %96 = vmatpush1.msra.mxu0 %v81
    %97 = vmatprep.subr.mxu0 0.0
    %98 = vmatpush1.msra.mxu0 0.0
    %99 = vmatprep.subr.mxu0 0.0
    %100 = vmatpush1.msra.mxu0 0.0
    %101 = vmatprep.subr.mxu0 0.0
    %102 = vmatpush1.msra.mxu0 0.0
    %103 = vmatprep.subr.mxu0 0.0
    %104 = vmatpush1.msra.mxu0 0.0
    %105 = vmatprep.subr.mxu0 0.0
    %106 = vmatpush1.msra.mxu0 0.0
    %107 = vmatprep.subr.mxu0 0.0
    %108 = vmatpush1.msra.mxu0 0.0
    %109 = vmatprep.subr.mxu0 0.0
    %110 = vmatpush1.msra.mxu0 0.0
    %111 = vmatprep.subr.mxu0 0.0
    %112 = vmatpush1.msra.mxu0 0.0
    %113 = vmatprep.subr.mxu0 0.0
    %114 = vmatpush1.msra.mxu0 0.0
    %115 = vmatprep.subr.mxu0 0.0
    %116 = vmatpush1.msra.mxu0 0.0
    %117 = vmatprep.subr.mxu0 0.0
    %118 = vmatpush1.msra.mxu0 0.0
    %119 = vmatprep.subr.mxu0 0.0
    %120 = vmatpush1.msra.mxu0 0.0
    %121 = vmatprep.subr.mxu0 0.0
    %122 = vmatpush1.msra.mxu0 0.0
    %123 = vmatprep.subr.mxu0 0.0
    %124 = vmatpush1.msra.mxu0 0.0
    %125 = vmatprep.subr.mxu0 0.0
    %126 = vmatpush1.msra.mxu0 0.0
    %127 = vmatprep.subr.mxu0 0.0
    %128 = vmatpush1.msra.mxu0 0.0
    %129 = vmatprep.subr.mxu0 0.0
    %130 = vmatpush1.msra.mxu0 0.0
    %131 = vmatprep.subr.mxu0 0.0
    %132 = vmatpush1.msra.mxu0 0.0
    %133 = vmatprep.subr.mxu0 0.0
    %134 = vmatpush1.msra.mxu0 0.0
    %135 = vmatprep.subr.mxu0 0.0
    %136 = vmatpush1.msra.mxu0 0.0
    %137 = vmatprep.subr.mxu0 0.0
    %138 = vmatpush1.msra.mxu0 0.0
    %139 = vmatprep.subr.mxu0 0.0
    %140 = vmatpush1.msra.mxu0 0.0
    %141 = vmatprep.subr.mxu0 0.0
    %142 = vmatpush1.msra.mxu0 0.0
    %143 = vmatprep.subr.mxu0 0.0
    %144 = vmatpush1.msra.mxu0 0.0
    %145 = vmatprep.subr.mxu0 0.0
    %146 = vmatpush1.msra.mxu0 0.0
    %147 = vmatprep.subr.mxu0 0.0
    %148 = vmatpush1.msra.mxu0 0.0
    %149 = vmatprep.subr.mxu0 0.0
    %150 = vmatpush1.msra.mxu0 0.0
    %151 = vmatprep.subr.mxu0 0.0
    %152 = vmatpush1.msra.mxu0 0.0
    %153 = vmatprep.subr.mxu0 0.0
    %154 = vmatpush1.msra.mxu0 0.0
    %155 = vmatprep.subr.mxu0 0.0
    %156 = vmatpush1.msra.mxu0 0.0
    %157 = vmatprep.mubr.f32.mxu0 0.0
    %158 = vmatmul.mubr.f32.gmra.mrb[0].mxu0 %v91
    %v159 = vpop.f32.mrb[0].mxu0
    %v160 = vadd.f32 %v87, %v159
    %v161 = vpop.f32.mrb[0].mxu0
    %162 = vdwg.mxu0
    %v163 = vmax.f32 %v160, 0.0
    %v164 = vld [vmem:[#allocation6] sm:$0xff]
    %v165 = vld [vmem:[#allocation6 + $0x8] sm:$0xff]
    %v166 = vld [vmem:[#allocation6 + $0x10] sm:$0xff]
    %v167 = vld [vmem:[#allocation6 + $0x18] sm:$0xff]
    %v168 = vld [vmem:[#allocation6 + $0x20] sm:$0xff]
    %v169 = vld [vmem:[#allocation6 + $0x28] sm:$0xff]
    %v170 = vld [vmem:[#allocation6 + $0x30] sm:$0xff]
    %v171 = vld [vmem:[#allocation6 + $0x38] sm:$0xff]
    %v172 = vld [vmem:[#allocation6 + $0x40] sm:$0xff]
    %v173 = vld [vmem:[#allocation6 + $0x48] sm:$0xff]
    %v174 = vld [vmem:[#allocation6 + $0x50] sm:$0xff]
    %v175 = vld [vmem:[#allocation6 + $0x58] sm:$0xff]
    %v176 = vld [vmem:[#allocation6 + $0x60] sm:$0xff]
    %v177 = vld [vmem:[#allocation6 + $0x68] sm:$0xff]
    %v178 = vld [vmem:[#allocation6 + $0x70] sm:$0xff]
    %v179 = vld [vmem:[#allocation6 + $0x78] sm:$0xff]
    %v180 = vld [vmem:[%s4] sm:$0x1]
    %v182 = vlaneseq
    %v183 = vshrl.u32 %v182, 7
    %v184 = vsub.s32 0, %v183
    %v185 = vrot.slane %v180, %v184
    %187 = vmatprep.subr.mxu0 0.0
    %188 = vmatpush1.msra.mxu0 %v164
    %189 = vmatprep.subr.mxu0 0.0
    %190 = vmatpush1.msra.mxu0 %v165
    %191 = vmatprep.subr.mxu0 0.0
    %192 = vmatpush1.msra.mxu0 %v166
    %193 = vmatprep.subr.mxu0 0.0
    %194 = vmatpush1.msra.mxu0 %v167
    %195 = vmatprep.subr.mxu0 0.0
    %196 = vmatpush1.msra.mxu0 %v168
    %197 = vmatprep.subr.mxu0 0.0
    %198 = vmatpush1.msra.mxu0 %v169
    %199 = vmatprep.subr.mxu0 0.0
    %200 = vmatpush1.msra.mxu0 %v170
    %201 = vmatprep.subr.mxu0 0.0
    %202 = vmatpush1.msra.mxu0 %v171
    %203 = vmatprep.subr.mxu0 0.0
    %204 = vmatpush1.msra.mxu0 %v172
    %205 = vmatprep.subr.mxu0 0.0
    %206 = vmatpush1.msra.mxu0 %v173
    %207 = vmatprep.subr.mxu0 0.0
    %208 = vmatpush1.msra.mxu0 %v174
    %209 = vmatprep.subr.mxu0 0.0
    %210 = vmatpush1.msra.mxu0 %v175
    %211 = vmatprep.subr.mxu0 0.0
    %212 = vmatpush1.msra.mxu0 %v176
    %213 = vmatprep.subr.mxu0 0.0
    %214 = vmatpush1.msra.mxu0 %v177
    %215 = vmatprep.subr.mxu0 0.0
    %216 = vmatpush1.msra.mxu0 %v178
    %217 = vmatprep.subr.mxu0 0.0
    %218 = vmatpush1.msra.mxu0 %v179
    %219 = vmatprep.subr.mxu0 0.0
    %220 = vmatpush1.msra.mxu0 0.0
    %221 = vmatprep.subr.mxu0 0.0
    %222 = vmatpush1.msra.mxu0 0.0
    %223 = vmatprep.subr.mxu0 0.0
    %224 = vmatpush1.msra.mxu0 0.0
    %225 = vmatprep.subr.mxu0 0.0
    %226 = vmatpush1.msra.mxu0 0.0
    %227 = vmatprep.subr.mxu0 0.0
    %228 = vmatpush1.msra.mxu0 0.0
    %229 = vmatprep.subr.mxu0 0.0
    %230 = vmatpush1.msra.mxu0 0.0
    %231 = vmatprep.subr.mxu0 0.0
    %232 = vmatpush1.msra.mxu0 0.0
    %233 = vmatprep.subr.mxu0 0.0
    %234 = vmatpush1.msra.mxu0 0.0
    %235 = vmatprep.subr.mxu0 0.0
    %236 = vmatpush1.msra.mxu0 0.0
    %237 = vmatprep.subr.mxu0 0.0
    %238 = vmatpush1.msra.mxu0 0.0
    %239 = vmatprep.subr.mxu0 0.0
    %240 = vmatpush1.msra.mxu0 0.0
    %241 = vmatprep.subr.mxu0 0.0
    %242 = vmatpush1.msra.mxu0 0.0
    %243 = vmatprep.subr.mxu0 0.0
    %244 = vmatpush1.msra.mxu0 0.0
    %245 = vmatprep.subr.mxu0 0.0
    %246 = vmatpush1.msra.mxu0 0.0
    %247 = vmatprep.subr.mxu0 0.0
    %248 = vmatpush1.msra.mxu0 0.0
    %249 = vmatprep.subr.mxu0 0.0
    %250 = vmatpush1.msra.mxu0 0.0
    %251 = vmatprep.mubr.f32.mxu0 0.0
    %252 = vmatmul.mubr.f32.gmra.mrb[0].mxu0 %v163
    %v253 = vpop.f32.mrb[0].mxu0
    %v254 = vadd.f32 %v185, %v253
    %v255 = vpop.f32.mrb[0].mxu0
    %256 = vdwg.mxu0
    %v257 = vmax.f32 %v254, 0.0
    %v258 = vld [vmem:[#allocation7] sm:$0xff]
    %v259 = vld [vmem:[#allocation7 + $0x8] sm:$0xff]
    %v260 = vld [vmem:[#allocation7 + $0x10] sm:$0xff]
    %v261 = vld [vmem:[#allocation7 + $0x18] sm:$0xff]
    %v262 = vld [vmem:[#allocation7 + $0x20] sm:$0xff]
    %v263 = vld [vmem:[#allocation7 + $0x28] sm:$0xff]
    %v264 = vld [vmem:[#allocation7 + $0x30] sm:$0xff]
    %v265 = vld [vmem:[#allocation7 + $0x38] sm:$0xff]
    %v266 = vld [vmem:[#allocation7 + $0x40] sm:$0xff]
    %v267 = vld [vmem:[#allocation7 + $0x48] sm:$0xff]
    %v268 = vld [vmem:[#allocation7 + $0x50] sm:$0xff]
    %v269 = vld [vmem:[#allocation7 + $0x58] sm:$0xff]
    %v270 = vld [vmem:[#allocation7 + $0x60] sm:$0xff]
    %v271 = vld [vmem:[#allocation7 + $0x68] sm:$0xff]
    %v272 = vld [vmem:[#allocation7 + $0x70] sm:$0xff]
    %v273 = vld [vmem:[#allocation7 + $0x78] sm:$0xff]
    %v274 = vld [vmem:[%s6] sm:$0x1]
    %v276 = vlaneseq
    %v277 = vshrl.u32 %v276, 7
    %v278 = vsub.s32 0, %v277
    %v279 = vrot.slane %v274, %v278
    %281 = vmatprep.subr.mxu0 0.0
    %282 = vmatpush1.msra.mxu0 %v258
    %283 = vmatprep.subr.mxu0 0.0
    %284 = vmatpush1.msra.mxu0 %v259
    %285 = vmatprep.subr.mxu0 0.0
    %286 = vmatpush1.msra.mxu0 %v260
    %287 = vmatprep.subr.mxu0 0.0
    %288 = vmatpush1.msra.mxu0 %v261
    %289 = vmatprep.subr.mxu0 0.0
    %290 = vmatpush1.msra.mxu0 %v262
    %291 = vmatprep.subr.mxu0 0.0
    %292 = vmatpush1.msra.mxu0 %v263
    %293 = vmatprep.subr.mxu0 0.0
    %294 = vmatpush1.msra.mxu0 %v264
    %295 = vmatprep.subr.mxu0 0.0
    %296 = vmatpush1.msra.mxu0 %v265
    %297 = vmatprep.subr.mxu0 0.0
    %298 = vmatpush1.msra.mxu0 %v266
    %299 = vmatprep.subr.mxu0 0.0
    %300 = vmatpush1.msra.mxu0 %v267
    %301 = vmatprep.subr.mxu0 0.0
    %302 = vmatpush1.msra.mxu0 %v268
    %303 = vmatprep.subr.mxu0 0.0
    %304 = vmatpush1.msra.mxu0 %v269
    %305 = vmatprep.subr.mxu0 0.0
    %306 = vmatpush1.msra.mxu0 %v270
    %307 = vmatprep.subr.mxu0 0.0
    %308 = vmatpush1.msra.mxu0 %v271
    %309 = vmatprep.subr.mxu0 0.0
    %310 = vmatpush1.msra.mxu0 %v272
    %311 = vmatprep.subr.mxu0 0.0
    %312 = vmatpush1.msra.mxu0 %v273
    %313 = vmatprep.subr.mxu0 0.0
    %314 = vmatpush1.msra.mxu0 0.0
    %315 = vmatprep.subr.mxu0 0.0
    %316 = vmatpush1.msra.mxu0 0.0
    %317 = vmatprep.subr.mxu0 0.0
    %318 = vmatpush1.msra.mxu0 0.0
    %319 = vmatprep.subr.mxu0 0.0
    %320 = vmatpush1.msra.mxu0 0.0
    %321 = vmatprep.subr.mxu0 0.0
    %322 = vmatpush1.msra.mxu0 0.0
    %323 = vmatprep.subr.mxu0 0.0
    %324 = vmatpush1.msra.mxu0 0.0
    %325 = vmatprep.subr.mxu0 0.0
    %326 = vmatpush1.msra.mxu0 0.0
    %327 = vmatprep.subr.mxu0 0.0
    %328 = vmatpush1.msra.mxu0 0.0
    %329 = vmatprep.subr.mxu0 0.0
    %330 = vmatpush1.msra.mxu0 0.0
    %331 = vmatprep.subr.mxu0 0.0
    %332 = vmatpush1.msra.mxu0 0.0
    %333 = vmatprep.subr.mxu0 0.0
    %334 = vmatpush1.msra.mxu0 0.0
    %335 = vmatprep.subr.mxu0 0.0
    %336 = vmatpush1.msra.mxu0 0.0
    %337 = vmatprep.subr.mxu0 0.0
    %338 = vmatpush1.msra.mxu0 0.0
    %339 = vmatprep.subr.mxu0 0.0
    %340 = vmatpush1.msra.mxu0 0.0
    %341 = vmatprep.subr.mxu0 0.0
    %342 = vmatpush1.msra.mxu0 0.0
    %343 = vmatprep.subr.mxu0 0.0
    %344 = vmatpush1.msra.mxu0 0.0
    %345 = vmatprep.mubr.f32.mxu0 0.0
    %346 = vmatmul.mubr.f32.gmra.mrb[0].mxu0 %v257
    %v347 = vpop.f32.mrb[0].mxu0
    %v348 = vadd.f32 %v279, %v347
    %v349 = vpop.f32.mrb[0].mxu0
    %350 = vdwg.mxu0
    %351 = vst [vmem:[%s7] sm:$0xff] %v348
    // Predicated region
    $region46: #{_dqn_forward_impl.1} parent=1 // pred_check
      _
    $region47: #{_dqn_forward_impl.1} parent=1 // pred_check_branch
      %353 = sbr.rel (0) target = $region49
    $region48: #{_dqn_forward_impl.1} parent=1 // pred_region
      _
    $region49: #{_dqn_forward_impl.1} parent=1 // pred_fallthru
      _
    // Predicated region
    $region50: #{_dqn_forward_impl.1} parent=1 // pred_check
      _
    $region51: #{_dqn_forward_impl.1} parent=1 // pred_check_branch
      %355 = sbr.rel (0) target = $region53
    $region52: #{_dqn_forward_impl.1} parent=1 // pred_region
      _
    $region53: #{_dqn_forward_impl.1} parent=1 // pred_fallthru
      _
    %356 = vsyncpa [#allocation3], 1
    %357 = vsyncpa [#allocation5], 1
    %358 = vsyncpa [#allocation8], 1

</llo_original>
